<compile_context>
chip_gen: v7x
topology: tpu7x:2x2x1
jax: 0.10.0
libtpu: 0.0.40
codegen_flags: <defaults>
</compile_context>

<pallas_src>
import functools

import jax
import jax.numpy as jnp
from jax.experimental import pallas as pl
from jax.experimental.pallas import tpu as pltpu


def _round_up(n: int, m: int) -> int:
    return ((n + m - 1) // m) * m


def mlp_kernel(x_ref, w1_ref, b1_ref, w2_ref, b2_ref, o_ref):
    # fc1: x @ W1 + b1  (hidden lane-padded to a multiple of 128)
    h = jnp.dot(x_ref[...], w1_ref[...], preferred_element_type=jnp.float32)
    h = h + b1_ref[...]                # (1, hid_pad) broadcasts over the batch tile
    # ReLU (padded hidden columns are 0 + 0 -> stay 0 through ReLU)
    h = jnp.maximum(h, 0.0)
    # dropout1 (p=0.1): identity in eval mode (inference forward pass)
    # TODO(synk): training-mode dropout (pltpu.prng_seed + pltpu.prng_random_bits mask) not emitted here.
    # fc2: h @ W2 + b2  (padded W2 rows/cols are zero -> padded output columns are exactly b2-pad = 0)
    out = jnp.dot(h, w2_ref[...], preferred_element_type=jnp.float32)
    out = out + b2_ref[...]
    o_ref[...] = out.astype(o_ref.dtype)


@functools.partial(jax.jit, static_argnames=("batch_tile",))
def review_rating_predictor(x, w1, b1, w2, b2, *, batch_tile: int = 128):
    """Forward pass of ReviewRatingPredictor.

    x : [B, input_size]        float32
    w1: [input_size, hidden]   float32 (transposed PyTorch fc1.weight)
    b1: [1, hidden]            float32
    w2: [hidden, output]       float32 (transposed PyTorch fc2.weight)
    b2: [1, output]            float32
    returns [B, output]        float32
    """
    B, in_features = x.shape
    hidden = w1.shape[1]
    out_size = w2.shape[1]

    # --- lane-pad hidden and output dims to multiples of 128 (zero padding => exact results) ---
    hid_pad = _round_up(hidden, 128)
    out_pad = _round_up(out_size, 128)
    w1p = jnp.pad(w1, ((0, 0), (0, hid_pad - hidden)))
    b1p = jnp.pad(b1, ((0, 0), (0, hid_pad - hidden)))
    w2p = jnp.pad(w2, ((0, hid_pad - hidden), (0, out_pad - out_size)))
    b2p = jnp.pad(b2, ((0, 0), (0, out_pad - out_size)))

    # --- batch tiling: sublane-align and tile large batches over a parallel grid ---
    tb = min(_round_up(B, 8), batch_tile)       # tile rows (multiple of 8 sublanes)
    b_pad = _round_up(B, tb)                    # total padded batch (multiple of tb)
    xp = jnp.pad(x, ((0, b_pad - B), (0, 0)))

    grid = (b_pad // tb,)
    out = pl.pallas_call(
        mlp_kernel,
        out_shape=jax.ShapeDtypeStruct((b_pad, out_pad), x.dtype),
        grid=grid,
        in_specs=[
            pl.BlockSpec((tb, in_features), lambda i: (i, 0)),   # batch tile of activations
            pl.BlockSpec((in_features, hid_pad), lambda i: (0, 0)),  # weights replicated per tile
            pl.BlockSpec((1, hid_pad), lambda i: (0, 0)),
            pl.BlockSpec((hid_pad, out_pad), lambda i: (0, 0)),
            pl.BlockSpec((1, out_pad), lambda i: (0, 0)),
        ],
        out_specs=pl.BlockSpec((tb, out_pad), lambda i: (i, 0)),
        compiler_params=pltpu.CompilerParams(
            dimension_semantics=("parallel",),  # batch tiles are independent -> megacore split
        ),
    )(xp, w1p, b1p, w2p, b2p)

    # Slice away batch padding and the lane-padded output columns.
    return out[:B, :out_size]


def init_params(key, input_size, hidden_size, output_size):
    """Deterministic init mimicking nn.Linear's uniform(-1/sqrt(fan_in), +1/sqrt(fan_in))."""
    k1, k2, k3, k4 = jax.random.split(key, 4)
    lim1 = 1.0 / jnp.sqrt(jnp.float32(input_size))
    lim2 = 1.0 / jnp.sqrt(jnp.float32(hidden_size))
    # Stored already transposed to [in, out].
    w1 = jax.random.uniform(k1, (input_size, hidden_size), jnp.float32, -lim1, lim1)
    b1 = jax.random.uniform(k2, (1, hidden_size), jnp.float32, -lim1, lim1)
    w2 = jax.random.uniform(k3, (hidden_size, output_size), jnp.float32, -lim2, lim2)
    b2 = jax.random.uniform(k4, (1, output_size), jnp.float32, -lim2, lim2)
    return w1, b1, w2, b2


if __name__ == "__main__":
    key = jax.random.PRNGKey(0)
    kx, kp = jax.random.split(key)

    batch = 8
    input_size = 32
    hidden_sizes = (100,)
    output_size = 5

    x = jax.random.normal(kx, (batch, input_size), jnp.float32)
    w1, b1, w2, b2 = init_params(kp, input_size, hidden_sizes[0], output_size)

    out = review_rating_predictor(x, w1, b1, w2, b2)
    out = jax.block_until_ready(out)

    # Reference check in plain JAX (dropout is identity in eval mode).
    ref = jnp.maximum(x @ w1 + b1, 0.0) @ w2 + b2
    assert out.shape == (batch, output_size), out.shape
    assert jnp.allclose(out, ref, atol=1e-5, rtol=1e-5)

    # Also exercise a batched path that actually uses the grid (2 tiles of 128 rows).
    xb = jax.random.normal(kx, (256, input_size), jnp.float32)
    outb = jax.block_until_ready(review_rating_predictor(xb, w1, b1, w2, b2))
    refb = jnp.maximum(xb @ w1 + b1, 0.0) @ w2 + b2
    assert outb.shape == (256, output_size)
    assert jnp.allclose(outb, refb, atol=1e-5, rtol=1e-5)

    print("KERNEL_OK")
</pallas_src>

<mosaic_0001>
module attributes {stable_mosaic.version = 11 : i64} {
  func.func @mlp_kernel(%arg0: i32, %arg1: memref<8x32xf32, #tpu.memory_space<vmem>>, %arg2: memref<32x128xf32, #tpu.memory_space<vmem>>, %arg3: memref<1x128xf32, #tpu.memory_space<vmem>>, %arg4: memref<128x128xf32, #tpu.memory_space<vmem>>, %arg5: memref<1x128xf32, #tpu.memory_space<vmem>>, %arg6: memref<8x128xf32, #tpu.memory_space<vmem>>) attributes {dimension_semantics = [#tpu.dimension_semantics<parallel>], iteration_bounds = array<i64: 1>, scalar_prefetch = 0 : i64, scratch_operands = 0 : i64, tpu.core_type = #tpu.core_type<tc>, window_params = [{transform_indices = @transform_0, window_bounds = array<i64: 8, 32>}, {pipeline_mode = #tpu.pipeline_mode<synchronous>, transform_indices = @transform_1, window_bounds = array<i64: 32, 128>}, {pipeline_mode = #tpu.pipeline_mode<synchronous>, transform_indices = @transform_2, window_bounds = array<i64: 1, 128>}, {pipeline_mode = #tpu.pipeline_mode<synchronous>, transform_indices = @transform_3, window_bounds = array<i64: 128, 128>}, {pipeline_mode = #tpu.pipeline_mode<synchronous>, transform_indices = @transform_4, window_bounds = array<i64: 1, 128>}, {transform_indices = @transform_5, window_bounds = array<i64: 8, 128>}]} {
    %c0 = arith.constant 0 : index
    %c0_0 = arith.constant 0 : index
    %0 = vector.load %arg1[%c0, %c0_0] : memref<8x32xf32, #tpu.memory_space<vmem>>, vector<8x32xf32>
    %c0_1 = arith.constant 0 : index
    %c0_2 = arith.constant 0 : index
    %1 = vector.load %arg2[%c0_1, %c0_2] : memref<32x128xf32, #tpu.memory_space<vmem>>, vector<32x128xf32>
    %cst = arith.constant dense<0.000000e+00> : vector<8x128xf32>
    %2 = tpu.matmul %0, %1, %cst {dimension_numbers = #tpu.dot_dimension_numbers<[1], [0], [0], [1], [0, 0, 1, 1], [], []>} : vector<8x32xf32>, vector<32x128xf32>, vector<8x128xf32> -> vector<8x128xf32>
    %c0_3 = arith.constant 0 : index
    %c0_4 = arith.constant 0 : index
    %3 = vector.load %arg3[%c0_3, %c0_4] : memref<1x128xf32, #tpu.memory_space<vmem>>, vector<1x128xf32>
    %4 = vector.broadcast %3 : vector<1x128xf32> to vector<8x128xf32>
    %5 = arith.addf %2, %4 : vector<8x128xf32>
    %cst_5 = arith.constant 0.000000e+00 : f32
    %6 = vector.broadcast %cst_5 : f32 to vector<8x128xf32>
    %7 = arith.maximumf %5, %6 : vector<8x128xf32>
    %c0_6 = arith.constant 0 : index
    %c0_7 = arith.constant 0 : index
    %8 = vector.load %arg4[%c0_6, %c0_7] : memref<128x128xf32, #tpu.memory_space<vmem>>, vector<128x128xf32>
    %cst_8 = arith.constant dense<0.000000e+00> : vector<8x128xf32>
    %9 = tpu.matmul %7, %8, %cst_8 {dimension_numbers = #tpu.dot_dimension_numbers<[1], [0], [0], [1], [0, 0, 1, 1], [], []>} : vector<8x128xf32>, vector<128x128xf32>, vector<8x128xf32> -> vector<8x128xf32>
    %c0_9 = arith.constant 0 : index
    %c0_10 = arith.constant 0 : index
    %10 = vector.load %arg5[%c0_9, %c0_10] : memref<1x128xf32, #tpu.memory_space<vmem>>, vector<1x128xf32>
    %11 = vector.broadcast %10 : vector<1x128xf32> to vector<8x128xf32>
    %12 = arith.addf %9, %11 : vector<8x128xf32>
    %c0_11 = arith.constant 0 : index
    %c0_12 = arith.constant 0 : index
    %13 = vector.load %arg6[%c0_11, %c0_12] : memref<8x128xf32, #tpu.memory_space<vmem>>, vector<8x128xf32>
    tpu.vector_store %arg6[%c0_11, %c0_12], %12 {strides = array<i32>} : memref<8x128xf32, #tpu.memory_space<vmem>>, vector<8x128xf32>,
    return
  }
  func.func @transform_0(%arg0: i32) -> (i32, i32) {
    %c0_i32 = arith.constant 0 : i32
    %c0_i32_0 = arith.constant 0 : i32
    return %arg0, %c0_i32 : i32, i32
  }
  func.func @transform_1(%arg0: i32) -> (i32, i32) {
    %c0_i32 = arith.constant 0 : i32
    %c0_i32_0 = arith.constant 0 : i32
    %c0_i32_1 = arith.constant 0 : i32
    return %c0_i32, %c0_i32_0 : i32, i32
  }
  func.func @transform_2(%arg0: i32) -> (i32, i32) {
    %c0_i32 = arith.constant 0 : i32
    %c0_i32_0 = arith.constant 0 : i32
    %c0_i32_1 = arith.constant 0 : i32
    return %c0_i32, %c0_i32_0 : i32, i32
  }
  func.func @transform_3(%arg0: i32) -> (i32, i32) {
    %c0_i32 = arith.constant 0 : i32
    %c0_i32_0 = arith.constant 0 : i32
    %c0_i32_1 = arith.constant 0 : i32
    return %c0_i32, %c0_i32_0 : i32, i32
  }
  func.func @transform_4(%arg0: i32) -> (i32, i32) {
    %c0_i32 = arith.constant 0 : i32
    %c0_i32_0 = arith.constant 0 : i32
    %c0_i32_1 = arith.constant 0 : i32
    return %c0_i32, %c0_i32_0 : i32, i32
  }
  func.func @transform_5(%arg0: i32) -> (i32, i32) {
    %c0_i32 = arith.constant 0 : i32
    %c0_i32_0 = arith.constant 0 : i32
    return %arg0, %c0_i32 : i32, i32
  }
}

</mosaic_0001>

<llo_original>
// kernel: review_rating_predictor.1
$region0: #{review_rating_predictor.1}
  #allocation0 [shape = 'u32[]', space=smem, size = 0x4, offset = 0x4, fixed_abs, tag = 'smem constant byte address 0x4 - core index']
  #allocation1 [shape = 'u32[144,128]{1,0:T(1,128)}', space=vmem, size = 0x12000, scoped, tag = 'internal scratch']
  %s0 = inlined_call_operand.vmem [shape: f32[8,32], index: 0, kind: input, shape index: {}]
  %s1 = inlined_call_operand.vmem [shape: f32[32,128], index: 1, kind: input, shape index: {}]
  %s2 = inlined_call_operand.vmem [shape: f32[1,128], index: 2, kind: input, shape index: {}]
  %s3 = inlined_call_operand.vmem [shape: f32[128,128], index: 3, kind: input, shape index: {}]
  %s4 = inlined_call_operand.vmem [shape: f32[1,128], index: 4, kind: input, shape index: {}]
  %s5 = inlined_call_operand.hbm [shape: f32[8,128], index: 5, kind: output, shape index: {}]
  %s6 = sld [smem:[#allocation0]]
  $region30: #{review_rating_predictor.1} parent=0
    _
  %s8 = ssub.s32 1, %s6
  %s9 = scalar_select 0, %s8, %s6
  $region1: #{review_rating_predictor.1} parent=0
    #allocation2 [shape = 'u8[4096]{0}', space=vmem, size = 0x1000, scoped, tag = 'output window, operand 0, single buffered']
    #allocation3 [shape = 's32[1]{0}', space=sflag, size = 0x4, scoped, tag = 'scoped memory for review_rating_predictor.1']
    %10 = vsyncpa [#allocation3], 0
    // Predicated region
    $region2: #{review_rating_predictor.1} parent=1 // pred_check
      _
    $region3: #{review_rating_predictor.1} parent=1 // pred_check_branch
      %12 = sbr.rel (0) target = $region5
    $region4: #{review_rating_predictor.1} parent=1 // pred_region
      _
    $region5: #{review_rating_predictor.1} parent=1 // pred_fallthru
      _
    // Predicated region
    $region6: #{review_rating_predictor.1} parent=1 // pred_check
      _
    $region7: #{review_rating_predictor.1} parent=1 // pred_check_branch
      %14 = sbr.rel (0) target = $region9
    $region8: #{review_rating_predictor.1} parent=1 // pred_region
      _
    $region9: #{review_rating_predictor.1} parent=1 // pred_fallthru
      _
    // Predicated region
    $region10: #{review_rating_predictor.1} parent=1 // pred_check
      _
    $region11: #{review_rating_predictor.1} parent=1 // pred_check_branch
      %16 = sbr.rel (0) target = $region13
    $region12: #{review_rating_predictor.1} parent=1 // pred_region
      _
    $region13: #{review_rating_predictor.1} parent=1 // pred_fallthru
      _
    // Predicated region
    $region14: #{review_rating_predictor.1} parent=1 // pred_check
      _
    $region15: #{review_rating_predictor.1} parent=1 // pred_check_branch
      %18 = sbr.rel (0) target = $region17
    $region16: #{review_rating_predictor.1} parent=1 // pred_region
      _
    $region17: #{review_rating_predictor.1} parent=1 // pred_fallthru
      _
    // Predicated region
    $region18: #{review_rating_predictor.1} parent=1 // pred_check
      _
    $region19: #{review_rating_predictor.1} parent=1 // pred_check_branch
      %20 = sbr.rel (0) target = $region21
    $region20: #{review_rating_predictor.1} parent=1 // pred_region
      _
    $region21: #{review_rating_predictor.1} parent=1 // pred_fallthru
      _
    %v21 = vld [vmem:[%s0] sm:$0xff]
    %v22 = vld [vmem:[%s1] sm:$0xff]
    %v23 = vld [vmem:[%s1 + $0x8] sm:$0xff]
    %v24 = vld [vmem:[%s1 + $0x10] sm:$0xff]
    %v25 = vld [vmem:[%s1 + $0x18] sm:$0xff]
    %v26 = vld [vmem:[%s2] sm:$0x1]
    %v28 = vlaneseq
    %v29 = vshrl.u32 %v28, 7
    %v30 = vsub.s32 0, %v29
    %v31 = vrot.slane %v26, %v30
    %vm33 = vcmask 261120
    %v35 = vsel %vm33, %v21, 0
    %37 = vmatprep.subr.mxu0 0.0
    %38 = vmatpush1.msra.mxu0 %v22
    %39 = vmatprep.subr.mxu0 0.0
    %40 = vmatpush1.msra.mxu0 %v23
    %41 = vmatprep.subr.mxu0 0.0
    %42 = vmatpush1.msra.mxu0 %v24
    %43 = vmatprep.subr.mxu0 0.0
    %44 = vmatpush1.msra.mxu0 %v25
    %45 = vmatprep.subr.mxu0 0.0
    %46 = vmatpush1.msra.mxu0 0.0
    %47 = vmatprep.subr.mxu0 0.0
    %48 = vmatpush1.msra.mxu0 0.0
    %49 = vmatprep.subr.mxu0 0.0
    %50 = vmatpush1.msra.mxu0 0.0
    %51 = vmatprep.subr.mxu0 0.0
    %52 = vmatpush1.msra.mxu0 0.0
    %53 = vmatprep.subr.mxu0 0.0
    %54 = vmatpush1.msra.mxu0 0.0
    %55 = vmatprep.subr.mxu0 0.0
    %56 = vmatpush1.msra.mxu0 0.0
    %57 = vmatprep.subr.mxu0 0.0
    %58 = vmatpush1.msra.mxu0 0.0
    %59 = vmatprep.subr.mxu0 0.0
    %60 = vmatpush1.msra.mxu0 0.0
    %61 = vmatprep.subr.mxu0 0.0
    %62 = vmatpush1.msra.mxu0 0.0
    %63 = vmatprep.subr.mxu0 0.0
    %64 = vmatpush1.msra.mxu0 0.0
    %65 = vmatprep.subr.mxu0 0.0
    %66 = vmatpush1.msra.mxu0 0.0
    %67 = vmatprep.subr.mxu0 0.0
    %68 = vmatpush1.msra.mxu0 0.0
    %69 = vmatprep.subr.mxu0 0.0
    %70 = vmatpush1.msra.mxu0 0.0
    %71 = vmatprep.subr.mxu0 0.0
    %72 = vmatpush1.msra.mxu0 0.0
    %73 = vmatprep.subr.mxu0 0.0
    %74 = vmatpush1.msra.mxu0 0.0
    %75 = vmatprep.subr.mxu0 0.0
    %76 = vmatpush1.msra.mxu0 0.0
    %77 = vmatprep.subr.mxu0 0.0
    %78 = vmatpush1.msra.mxu0 0.0
    %79 = vmatprep.subr.mxu0 0.0
    %80 = vmatpush1.msra.mxu0 0.0
    %81 = vmatprep.subr.mxu0 0.0
    %82 = vmatpush1.msra.mxu0 0.0
    %83 = vmatprep.subr.mxu0 0.0
    %84 = vmatpush1.msra.mxu0 0.0
    %85 = vmatprep.subr.mxu0 0.0
    %86 = vmatpush1.msra.mxu0 0.0
    %87 = vmatprep.subr.mxu0 0.0
    %88 = vmatpush1.msra.mxu0 0.0
    %89 = vmatprep.subr.mxu0 0.0
    %90 = vmatpush1.msra.mxu0 0.0
    %91 = vmatprep.subr.mxu0 0.0
    %92 = vmatpush1.msra.mxu0 0.0
    %93 = vmatprep.subr.mxu0 0.0
    %94 = vmatpush1.msra.mxu0 0.0
    %95 = vmatprep.subr.mxu0 0.0
    %96 = vmatpush1.msra.mxu0 0.0
    %97 = vmatprep.subr.mxu0 0.0
    %98 = vmatpush1.msra.mxu0 0.0
    %99 = vmatprep.subr.mxu0 0.0
    %100 = vmatpush1.msra.mxu0 0.0
    %101 = vmatprep.mubr.f32.mxu0 0.0
    %102 = vmatmul.mubr.f32.gmra.mrb[0].mxu0 %v35
    %v103 = vpop.f32.mrb[0].mxu0
    %v104 = vadd.f32 %v31, %v103
    %v105 = vpop.f32.mrb[0].mxu0
    %106 = vdwg.mxu0
    %v107 = vmax.f32 %v104, 0.0
    %v108 = vld [vmem:[%s3] sm:$0xff]
    %v109 = vld [vmem:[%s3 + $0x8] sm:$0xff]
    %v110 = vld [vmem:[%s3 + $0x10] sm:$0xff]
    %v111 = vld [vmem:[%s3 + $0x18] sm:$0xff]
    %v112 = vld [vmem:[%s3 + $0x20] sm:$0xff]
    %v113 = vld [vmem:[%s3 + $0x28] sm:$0xff]
    %v114 = vld [vmem:[%s3 + $0x30] sm:$0xff]
    %v115 = vld [vmem:[%s3 + $0x38] sm:$0xff]
    %v116 = vld [vmem:[%s3 + $0x40] sm:$0xff]
    %v117 = vld [vmem:[%s3 + $0x48] sm:$0xff]
    %v118 = vld [vmem:[%s3 + $0x50] sm:$0xff]
    %v119 = vld [vmem:[%s3 + $0x58] sm:$0xff]
    %v120 = vld [vmem:[%s3 + $0x60] sm:$0xff]
    %v121 = vld [vmem:[%s3 + $0x68] sm:$0xff]
    %v122 = vld [vmem:[%s3 + $0x70] sm:$0xff]
    %v123 = vld [vmem:[%s3 + $0x78] sm:$0xff]
    %v124 = vld [vmem:[%s4] sm:$0x1]
    %v126 = vlaneseq
    %v127 = vshrl.u32 %v126, 7
    %v128 = vsub.s32 0, %v127
    %v129 = vrot.slane %v124, %v128
    %131 = vmatprep.subr.mxu0 0.0
    %132 = vmatpush1.msra.mxu0 %v108
    %133 = vmatprep.subr.mxu0 0.0
    %134 = vmatpush1.msra.mxu0 %v109
    %135 = vmatprep.subr.mxu0 0.0
    %136 = vmatpush1.msra.mxu0 %v110
    %137 = vmatprep.subr.mxu0 0.0
    %138 = vmatpush1.msra.mxu0 %v111
    %139 = vmatprep.subr.mxu0 0.0
    %140 = vmatpush1.msra.mxu0 %v112
    %141 = vmatprep.subr.mxu0 0.0
    %142 = vmatpush1.msra.mxu0 %v113
    %143 = vmatprep.subr.mxu0 0.0
    %144 = vmatpush1.msra.mxu0 %v114
    %145 = vmatprep.subr.mxu0 0.0
    %146 = vmatpush1.msra.mxu0 %v115
    %147 = vmatprep.subr.mxu0 0.0
    %148 = vmatpush1.msra.mxu0 %v116
    %149 = vmatprep.subr.mxu0 0.0
    %150 = vmatpush1.msra.mxu0 %v117
    %151 = vmatprep.subr.mxu0 0.0
    %152 = vmatpush1.msra.mxu0 %v118
    %153 = vmatprep.subr.mxu0 0.0
    %154 = vmatpush1.msra.mxu0 %v119
    %155 = vmatprep.subr.mxu0 0.0
    %156 = vmatpush1.msra.mxu0 %v120
    %157 = vmatprep.subr.mxu0 0.0
    %158 = vmatpush1.msra.mxu0 %v121
    %159 = vmatprep.subr.mxu0 0.0
    %160 = vmatpush1.msra.mxu0 %v122
    %161 = vmatprep.subr.mxu0 0.0
    %162 = vmatpush1.msra.mxu0 %v123
    %163 = vmatprep.subr.mxu0 0.0
    %164 = vmatpush1.msra.mxu0 0.0
    %165 = vmatprep.subr.mxu0 0.0
    %166 = vmatpush1.msra.mxu0 0.0
    %167 = vmatprep.subr.mxu0 0.0
    %168 = vmatpush1.msra.mxu0 0.0
    %169 = vmatprep.subr.mxu0 0.0
    %170 = vmatpush1.msra.mxu0 0.0
    %171 = vmatprep.subr.mxu0 0.0
    %172 = vmatpush1.msra.mxu0 0.0
    %173 = vmatprep.subr.mxu0 0.0
    %174 = vmatpush1.msra.mxu0 0.0
    %175 = vmatprep.subr.mxu0 0.0
    %176 = vmatpush1.msra.mxu0 0.0
    %177 = vmatprep.subr.mxu0 0.0
    %178 = vmatpush1.msra.mxu0 0.0
    %179 = vmatprep.subr.mxu0 0.0
    %180 = vmatpush1.msra.mxu0 0.0
    %181 = vmatprep.subr.mxu0 0.0
    %182 = vmatpush1.msra.mxu0 0.0
    %183 = vmatprep.subr.mxu0 0.0
    %184 = vmatpush1.msra.mxu0 0.0
    %185 = vmatprep.subr.mxu0 0.0
    %186 = vmatpush1.msra.mxu0 0.0
    %187 = vmatprep.subr.mxu0 0.0
    %188 = vmatpush1.msra.mxu0 0.0
    %189 = vmatprep.subr.mxu0 0.0
    %190 = vmatpush1.msra.mxu0 0.0
    %191 = vmatprep.subr.mxu0 0.0
    %192 = vmatpush1.msra.mxu0 0.0
    %193 = vmatprep.subr.mxu0 0.0
    %194 = vmatpush1.msra.mxu0 0.0
    %195 = vmatprep.mubr.f32.mxu0 0.0
    %196 = vmatmul.mubr.f32.gmra.mrb[0].mxu0 %v107
    %v197 = vpop.f32.mrb[0].mxu0
    %v198 = vadd.f32 %v129, %v197
    %v199 = vpop.f32.mrb[0].mxu0
    %200 = vdwg.mxu0
    %201 = vst [vmem:[#allocation2] sm:$0xff] %v198
    // Predicated region
    $region22: #{review_rating_predictor.1} parent=1 // pred_check
      _
    $region23: #{review_rating_predictor.1} parent=1 // pred_check_branch
      %203 = sbr.rel (0) target = $region25
    $region24: #{review_rating_predictor.1} parent=1 // pred_region
      %s205 = ssub.s32 128, 128
      %206 = vsyncadd [#allocation3], %s205
      %s208 = sshll.u32 [#allocation2], 4
      %s209 = int_to_ptr.vmem [resolvable:$true] %s208
      %211 = dma.vmem_to_hbm [thread:$0]  %s209, 128, %s5, [#allocation3]
    $region25: #{review_rating_predictor.1} parent=1 // pred_fallthru
      _
    // Predicated region
    $region26: #{review_rating_predictor.1} parent=1 // pred_check
      _
    $region27: #{review_rating_predictor.1} parent=1 // pred_check_branch
      %213 = sbr.rel (0) target = $region29
    $region28: #{review_rating_predictor.1} parent=1 // pred_region
      %214 = dma.done [#allocation3], 128
    $region29: #{review_rating_predictor.1} parent=1 // pred_fallthru
      _
    %215 = vsyncpa [#allocation3], 1

</llo_original>
